<compile_context>
chip_gen: v6e
topology: v6e:2x2x1
jax: 0.10.0
libtpu: 0.0.40
codegen_flags: <defaults>
</compile_context>

<pallas_src>
import functools

import jax
import jax.numpy as jnp
from jax import lax
from jax.experimental import pallas as pl
from jax.experimental.pallas import tpu as pltpu

K = 5      # Conv1d kernel size
PAD = 2    # Conv1d padding
LN_EPS = 1e-5
BN_EPS = 1e-5


def _layer_norm(x, gamma, beta):
    mu = jnp.mean(x, axis=-1, keepdims=True)
    var = jnp.mean((x - mu) ** 2, axis=-1, keepdims=True)
    return (x - mu) * lax.rsqrt(var + LN_EPS) * gamma + beta


@functools.lru_cache(maxsize=None)
def _roll_matches_jnp_roll() -> bool:
    """One-time on-device probe of pltpu.roll's shift direction.

    pltpu.roll is expected to match jnp.roll (y[i] = x[i - shift]); verifying it
    once guards against a convention change silently mirroring the convolution.
    """
    def probe(x_ref, o_ref):
        o_ref[...] = pltpu.roll(x_ref[...], 1, 0)

    x = jnp.tile(jnp.arange(8, dtype=jnp.int32)[:, None], (1, 128))   # x[i, j] = i
    out = pl.pallas_call(
        probe, out_shape=jax.ShapeDtypeStruct((8, 128), jnp.int32))(x)
    return int(out[1, 0]) == 0        # jnp.roll(x, 1, 0)[1] == x[0] == 0


def decoder_layer_kernel(
        # inputs
        x_ref, mask_ref,
        wconv_ref, bconv_ref, bnsc_ref, bnsh_ref, wsc_ref, bsc_ref,
        win_ref, bin_ref, wo_ref, bo_ref,
        g1_ref, be1_ref, w1_ref, b1_ref, w2_ref, b2_ref, g2_ref, be2_ref,
        # output
        o_ref,
        *, n_head, roll_np):
    f32, bf16 = jnp.float32, jnp.bfloat16
    NB, _, L = mask_ref.shape
    M, C = x_ref.shape                      # M = NB * L (batch folded into rows)
    dh = C // n_head

    x = x_ref[...]                          # (M, C) f32, stays in registers
    x_bf = x.astype(bf16)

    # ---------------- ConvBlock: BN(ReLU(conv_k5(x))) + conv_k1(x) ----------------
    # Shifted windows via pltpu.roll on the flat slab + edge masking (no padded
    # scratch, no misaligned sublane stores).  Cross-batch rows are out-of-range
    # rows for the tap and get masked to zero.
    pos = lax.broadcasted_iota(jnp.int32, (NB, L, C), 1).reshape(M, C)   # seq pos per row
    acc = jnp.zeros((M, C), f32)
    for k in range(K):                                       # static unroll (K = 5)
        d = k - PAD                                          # window offset in [-2, 2]
        if d == 0:
            xk = x_bf
        else:
            shift = ((-d) if roll_np else d) % M             # want xk[i] = x[i + d]
            xs = pltpu.roll(x, shift, 0)
            valid = jnp.logical_and(pos + d >= 0, pos + d < L)
            xk = jnp.where(valid, xs, 0.0).astype(bf16)
        acc += jnp.dot(xk, wconv_ref[k], preferred_element_type=f32)
    acc = jnp.maximum(acc + bconv_ref[...], 0.0)             # bias + ReLU
    acc = acc * bnsc_ref[...] + bnsh_ref[...]                # BatchNorm (eval affine)
    h = acc + jnp.dot(x_bf, wsc_ref[...], preferred_element_type=f32) + bsc_ref[...]

    # ------------- TransformerEncoderLayer (post-norm, ReLU FFN, eval) -------------
    h_bf = h.astype(bf16)
    # lane-dense fused QKV projection on the whole (NB*L, C) slab (1/sqrt(dh)
    # query scale is folded into the q columns in the wrapper)
    qkv = jnp.dot(h_bf, win_ref[...], preferred_element_type=f32) + bin_ref[...]
    qkv = qkv.reshape(NB, L, 3 * C)
    mask = mask_ref[...]                                     # (NB, 1, L) additive

    head_outs = []                                           # register accumulation
    for hh in range(n_head):                                 # static unroll
        lo = hh * dh
        q = qkv[:, :, lo:lo + dh].astype(bf16)               # (NB, L, dh)
        kk = qkv[:, :, C + lo:C + lo + dh].astype(bf16)
        v = qkv[:, :, 2 * C + lo:2 * C + lo + dh].astype(bf16)
        # batched over NB (no per-batch Python loop)
        s = jnp.einsum("bqd,bkd->bqk", q, kk, preferred_element_type=f32)
        s = s + mask                                         # additive key-pad mask
        s = s - jnp.max(s, axis=-1, keepdims=True)           # softmax in f32
        p = jnp.exp(s)
        # approx reciprocal uses the EUP slot; ~1e-3 rel err (use an exact divide
        # if validating against PyTorch at tight tolerances)
        p = p * pl.reciprocal(jnp.sum(p, axis=-1, keepdims=True), approx=True)
        head_outs.append(jnp.einsum("bqk,bkd->bqd", p.astype(bf16), v,
                                    preferred_element_type=f32))      # (NB, L, dh)

    # pack heads back along lanes and do ONE lane-dense out-projection matmul
    attn = jnp.concatenate(head_outs, axis=-1).reshape(M, C)
    attn = jnp.dot(attn.astype(bf16), wo_ref[...],
                   preferred_element_type=f32) + bo_ref[...]

    # TODO(synk): dropout1 / dropout2 / FFN dropout omitted (eval-mode identity).
    y = _layer_norm(h + attn, g1_ref[...], be1_ref[...])     # norm1 (f32)
    f1 = jnp.maximum(jnp.dot(y.astype(bf16), w1_ref[...],
                             preferred_element_type=f32) + b1_ref[...], 0.0)
    f2 = jnp.dot(f1.astype(bf16), w2_ref[...],
                 preferred_element_type=f32) + b2_ref[...]
    z = _layer_norm(y + f2, g2_ref[...], be2_ref[...])       # norm2 (f32)

    o_ref[...] = z.astype(o_ref.dtype)                       # single lane-dense store


@functools.partial(
    jax.jit,
    static_argnames=("n_head", "batch_blocks", "roll_np", "vmem_limit_bytes"))
def _decoder_layer_forward_jit(x_ncl, pad_mask, params, *, n_head, batch_blocks,
                               roll_np, vmem_limit_bytes):
    N, C, L = x_ncl.shape
    assert C % n_head == 0 and N % batch_blocks == 0
    NB = N // batch_blocks
    dh = C // n_head
    n_hid = params["w1_t"].shape[1]

    # ---- wrapper glue: layout, additive mask, eval-BN folding, bf16 weights ----
    x_flat = jnp.transpose(x_ncl, (0, 2, 1)).reshape(N * L, C)        # (N*L, C)
    add_mask = jnp.where(pad_mask, -1e9, 0.0).astype(jnp.float32).reshape(N, 1, L)

    bn_scale = (params["bn_gamma"] * lax.rsqrt(params["bn_var"] + BN_EPS)).reshape(1, C)
    bn_shift = params["bn_beta"].reshape(1, C) - params["bn_mean"].reshape(1, C) * bn_scale

    # fold the 1/sqrt(dh) query scaling into the q columns of the fused in-proj
    col_scale = jnp.concatenate(
        [jnp.full((C,), 1.0 / (dh ** 0.5), jnp.float32),
         jnp.ones((2 * C,), jnp.float32)])
    w_in = params["win_t"] * col_scale[None, :]                        # (C, 3C)
    b_in = (params["bin"] * col_scale).reshape(1, 3 * C)

    bf = lambda a: a.astype(jnp.bfloat16)

    def blk(shape):                                                    # whole-array block
        zeros = (0,) * len(shape)
        return pl.BlockSpec(shape, lambda g: zeros)

    out_flat = pl.pallas_call(
        functools.partial(decoder_layer_kernel, n_head=n_head, roll_np=roll_np),
        out_shape=jax.ShapeDtypeStruct((N * L, C), jnp.float32),
        grid=(batch_blocks,),
        in_specs=[
            pl.BlockSpec((NB * L, C), lambda g: (g, 0)),               # x rows (batch folded)
            pl.BlockSpec((NB, 1, L), lambda g: (g, 0, 0)),             # additive key-pad mask
            blk((K, C, C)), blk((1, C)), blk((1, C)), blk((1, C)),     # conv5 W/b, BN affine
            blk((C, C)), blk((1, C)),                                  # shortcut 1x1 conv
            blk((C, 3 * C)), blk((1, 3 * C)),                          # fused QKV in-proj
            blk((C, C)), blk((1, C)),                                  # attention out-proj
            blk((1, C)), blk((1, C)),                                  # norm1
            blk((C, n_hid)), blk((1, n_hid)),                          # FFN linear1
            blk((n_hid, C)), blk((1, C)),                              # FFN linear2
            blk((1, C)), blk((1, C)),                                  # norm2
        ],
        out_specs=pl.BlockSpec((NB * L, C), lambda g: (g, 0)),
        compiler_params=pltpu.CompilerParams(
            dimension_semantics=("parallel",),
            vmem_limit_bytes=vmem_limit_bytes),
    )(x_flat, add_mask,
      bf(params["wconv_t"]), params["bconv"].reshape(1, C), bn_scale, bn_shift,
      bf(params["wsc_t"]), params["bsc"].reshape(1, C),
      bf(w_in), b_in,
      bf(params["wout_t"]), params["bout"].reshape(1, C),
      params["ln1_g"].reshape(1, C), params["ln1_b"].reshape(1, C),
      bf(params["w1_t"]), params["b1"].reshape(1, n_hid),
      bf(params["w2_t"]), params["b2"].reshape(1, C),
      params["ln2_g"].reshape(1, C), params["ln2_b"].reshape(1, C))

    # module's final .permute(1, 2, 0): here (N, L, C) -> (N, C, L)
    return jnp.transpose(out_flat.reshape(N, L, C), (0, 2, 1))


def decoder_layer_forward(x_ncl, pad_mask, params, *, n_head,
                          batch_blocks=None, vmem_limit_bytes=None):
    N = x_ncl.shape[0]
    if batch_blocks is None:
        # Default to 2 grid steps so the "parallel" batch axis can shard across
        # v7x's two TensorCores; on single-TC v5e/v6e pass batch_blocks=1 (and a
        # raised vmem_limit_bytes) to maximise the folded matmul M dimension.
        batch_blocks = 2 if (N >= 2 and N % 2 == 0) else 1
    return _decoder_layer_forward_jit(
        x_ncl, pad_mask, params, n_head=n_head, batch_blocks=batch_blocks,
        roll_np=_roll_matches_jnp_roll(), vmem_limit_bytes=vmem_limit_bytes)


def init_params(key, C, n_hid):
    ks = jax.random.split(key, 16)
    n = lambda k, s, sc=0.1: sc * jax.random.normal(k, s, jnp.float32)
    w_conv = n(ks[0], (C, C, K))          # PyTorch Conv1d weight (out, in, k)
    w_sc = n(ks[1], (C, C, 1))            # shortcut 1x1 conv
    w_in = n(ks[2], (3 * C, C))           # MHA in_proj (3C, C)
    w_out = n(ks[3], (C, C))              # MHA out_proj
    w1 = n(ks[4], (n_hid, C))             # FFN linear1
    w2 = n(ks[5], (C, n_hid))             # FFN linear2
    return dict(
        wconv_t=jnp.transpose(w_conv, (2, 1, 0)),   # (K, Cin, Cout)
        bconv=n(ks[6], (C,)),
        bn_gamma=1.0 + n(ks[7], (C,)),
        bn_beta=n(ks[8], (C,)),
        bn_mean=n(ks[9], (C,)),
        bn_var=0.5 + jax.random.uniform(ks[10], (C,), jnp.float32),
        wsc_t=w_sc[:, :, 0].T,                      # (Cin, Cout)
        bsc=n(ks[11], (C,)),
        win_t=w_in.T,                               # (C, 3C)
        bin=n(ks[12], (3 * C,)),
        wout_t=w_out.T,                             # (C, C)
        bout=n(ks[13], (C,)),
        ln1_g=jnp.ones((C,), jnp.float32),
        ln1_b=jnp.zeros((C,), jnp.float32),
        w1_t=w1.T,                                  # (C, n_hid)
        b1=n(ks[14], (n_hid,)),
        w2_t=w2.T,                                  # (n_hid, C)
        b2=n(ks[15], (C,)),
        ln2_g=jnp.ones((C,), jnp.float32),
        ln2_b=jnp.zeros((C,), jnp.float32),
    )


if __name__ == "__main__":
    N, C, L = 2, 32, 16           # batch, n_channels (d_model), sequence length
    N_HEAD, N_HID = 4, 64

    key = jax.random.PRNGKey(0)
    kx, kp = jax.random.split(key)
    x = jax.random.normal(kx, (N, C, L), jnp.float32)          # NCL, like Conv1d input

    # key padding mask: True = padded position (batch 0 fully valid, batch 1 padded)
    lengths = jnp.array([L, L - 4])
    pad_mask = jnp.arange(L)[None, :] >= lengths[:, None]      # (N, L) bool

    params = init_params(kp, C, N_HID)

    out = decoder_layer_forward(x, pad_mask, params, n_head=N_HEAD)
    out = jax.block_until_ready(out)
    assert out.shape == (N, C, L), out.shape
    assert bool(jnp.all(jnp.isfinite(out)))
    print("KERNEL_OK")
</pallas_src>

<mosaic_0001>
module attributes {stable_mosaic.version = 11 : i64} {
  func.func @probe(%arg0: memref<8x128xi32, #tpu.memory_space<vmem>>, %arg1: memref<8x128xi32, #tpu.memory_space<vmem>>) attributes {dimension_semantics = [], scalar_prefetch = 0 : i64, scratch_operands = 0 : i64, tpu.core_type = #tpu.core_type<tc>} {
    %c0 = arith.constant 0 : index
    %c0_0 = arith.constant 0 : index
    %0 = vector.load %arg0[%c0, %c0_0] : memref<8x128xi32, #tpu.memory_space<vmem>>, vector<8x128xi32>
    %c1_i32 = arith.constant 1 : i32
    %1 = tpu.dynamic_rotate %0 by %c1_i32 dim 0 : vector<8x128xi32>, i32 -> vector<8x128xi32>
    %c0_1 = arith.constant 0 : index
    %c0_2 = arith.constant 0 : index
    %2 = vector.load %arg1[%c0_1, %c0_2] : memref<8x128xi32, #tpu.memory_space<vmem>>, vector<8x128xi32>
    tpu.vector_store %arg1[%c0_1, %c0_2], %1 {strides = array<i32>} : memref<8x128xi32, #tpu.memory_space<vmem>>, vector<8x128xi32>,
    return
  }
}

</mosaic_0001>

<llo_original>
// kernel: tpu_custom_call.1
$region0: #{tpu_custom_call.1}
  #allocation0 [shape = 'u32[]', space=smem, size = 0x4, offset = 0x4, fixed_abs, tag = 'smem constant byte address 0x4 - core index']
  #allocation1 [shape = 'u32[144,128]{1,0:T(1,128)}', space=vmem, size = 0x12000, scoped, tag = 'internal scratch']
  %s0 = inlined_call_operand.hbm [shape: s32[8,128], index: 0, kind: input, shape index: {}]
  %s1 = inlined_call_operand.hbm [shape: s32[8,128], index: 1, kind: output, shape index: {}]
  %s2 = sld [smem:[#allocation0]]
  $region18: #{tpu_custom_call.1} parent=0
    _
  %s4 = ssub.s32 1, %s2
  %s5 = scalar_select 0, %s4, %s2
  $region1: #{tpu_custom_call.1} parent=0
    #allocation2 [shape = 'u8[4096]{0}', space=vmem, size = 0x1000, scoped, tag = 'input window, operand 0, single buffered']
    #allocation3 [shape = 's32[1]{0}', space=sflag, size = 0x4, scoped, tag = 'scoped memory for tpu_custom_call.1']
    #allocation4 [shape = 's32[1]{0}', space=sflag, size = 0x4, scoped, tag = 'scoped memory for tpu_custom_call.1']
    #allocation5 [shape = 'u8[4096]{0}', space=vmem, size = 0x1000, scoped, tag = 'output window, operand 0, single buffered']
    %6 = vsyncpa [#allocation3], 0
    %7 = vsyncpa [#allocation4], 0
    // Predicated region
    $region2: #{tpu_custom_call.1} parent=1 // pred_check
      _
    $region3: #{tpu_custom_call.1} parent=1 // pred_check_branch
      %9 = sbr.rel (0) target = $region5
    $region4: #{tpu_custom_call.1} parent=1 // pred_region
      %s11 = ssub.s32 128, 128
      %12 = vsyncadd [#allocation3], %s11
      %s14 = sshll.u32 [#allocation2], 4
      %s15 = int_to_ptr.vmem [resolvable:$true] %s14
      %17 = dma.hbm_to_vmem [thread:$0]  %s0, 128, %s15, [#allocation3]
    $region5: #{tpu_custom_call.1} parent=1 // pred_fallthru
      _
    // Predicated region
    $region6: #{tpu_custom_call.1} parent=1 // pred_check
      _
    $region7: #{tpu_custom_call.1} parent=1 // pred_check_branch
      %19 = sbr.rel (0) target = $region9
    $region8: #{tpu_custom_call.1} parent=1 // pred_region
      %20 = dma.done [#allocation3], 128
    $region9: #{tpu_custom_call.1} parent=1 // pred_fallthru
      _
    %v21 = vld [vmem:[#allocation2] sm:$0xff]
    %v22 = vrot.slane %v21, 7
    %23 = vst [vmem:[#allocation5] sm:$0xff] %v22
    // Predicated region
    $region10: #{tpu_custom_call.1} parent=1 // pred_check
      _
    $region11: #{tpu_custom_call.1} parent=1 // pred_check_branch
      %25 = sbr.rel (0) target = $region13
    $region12: #{tpu_custom_call.1} parent=1 // pred_region
      %s27 = ssub.s32 128, 128
      %28 = vsyncadd [#allocation4], %s27
      %s30 = sshll.u32 [#allocation5], 4
      %s31 = int_to_ptr.vmem [resolvable:$true] %s30
      %33 = dma.vmem_to_hbm [thread:$0]  %s31, 128, %s1, [#allocation4]
    $region13: #{tpu_custom_call.1} parent=1 // pred_fallthru
      _
    // Predicated region
    $region14: #{tpu_custom_call.1} parent=1 // pred_check
      _
    $region15: #{tpu_custom_call.1} parent=1 // pred_check_branch
      %35 = sbr.rel (0) target = $region17
    $region16: #{tpu_custom_call.1} parent=1 // pred_region
      %36 = dma.done [#allocation4], 128
    $region17: #{tpu_custom_call.1} parent=1 // pred_fallthru
      _
    %37 = vsyncpa [#allocation3], 1
    %38 = vsyncpa [#allocation4], 1

</llo_original>
